<compile_context>
chip_gen: v7x
topology: tpu7x:2x2x1
jax: 0.10.0
libtpu: 0.0.40
codegen_flags: <defaults>
</compile_context>

<pallas_src>
import jax
import jax.numpy as jnp
from jax import lax
from jax.experimental import pallas as pl
from jax.experimental.pallas import tpu as pltpu


def _round_up(x, m):
    return ((x + m - 1) // m) * m


def _cdiv(a, b):
    return -(-a // b)


def _vmem_limit_bytes():
    """Generation-aware VMEM limit: ~70% of the physical per-TensorCore VMEM."""
    try:
        info = pltpu.get_tpu_info()
        cap = int(getattr(info, "vmem_capacity_bytes", 0))
    except Exception:
        cap = 0
    if cap <= 0:
        cap = 64 * 1024 * 1024  # conservative fallback (v7x per-TC capacity)
    return int(cap * 0.7)


def _block_footprint_bytes(bt, ts, sp, H, enc_itemsize):
    """Approximate VMEM bytes for one grid step: double-buffered enc/hq/out blocks
    plus the f32 multiply intermediate materialized by the VPU reduce."""
    Hp = _round_up(H, 128)          # lane padding
    ts_p = _round_up(ts, 8)         # sublane padding
    bt_p = _round_up(bt, 8)
    enc_block = bt * ts_p * Hp * enc_itemsize
    prod_tmp = bt * ts_p * Hp * 4   # enc * hq intermediate (f32)
    hq_block = bt_p * Hp * 4
    out_block = bt_p * _round_up(sp, 128) * 4
    return 2 * enc_block + prod_tmp + 2 * hq_block + 2 * out_block


def _choose_tiling(B, S, H, enc_itemsize, budget):
    """Pick (Bt, Ts, ns, Sp).

    Prefers the largest full-S batch block that fits the VMEM budget, with Bt a
    multiple of 8 capped at B//2 when B >= 16 (so the "parallel" batch axis has
    >= 2 steps and spans both v7x TensorCores). Falls back to tiling the sequence
    axis with a 128-multiple Ts for long sequences.
    """
    if B >= 16:
        bt_cands = [bt for bt in (512, 256, 128, 64, 32, 16, 8) if bt <= B // 2]
    else:
        bt_cands = [B]  # full batch dim is always a legal block shape

    # 1) Full-S blocks, largest batch block that fits.
    for bt in bt_cands:
        if _block_footprint_bytes(bt, S, S, H, enc_itemsize) <= budget:
            return bt, S, 1, S

    # 2) Tile the sequence axis: smallest Bt candidate, largest lane-aligned Ts.
    bt = bt_cands[-1]
    if S <= 128:
        return bt, S, 1, S  # nothing sensible to tile; accept the footprint
    ts = max(128, (S // 128) * 128)
    while ts > 128:
        sp = _cdiv(S, ts) * ts
        if _block_footprint_bytes(bt, ts, sp, H, enc_itemsize) <= budget:
            break
        ts -= 128
    ns = _cdiv(S, ts)
    return bt, ts, ns, ns * ts


def _make_attn_kernel(S, Ts, Sp, ns):
    def kernel(hq_ref, enc_ref, out_ref):
        hq = hq_ref[...].astype(jnp.float32)      # (Bt, H)   pre-projected hidden (hid @ W)
        enc = enc_ref[...].astype(jnp.float32)    # (Bt, Ts, H) encoder outputs (f32 or bf16 in HBM)

        # scores[b, s] = sum_h hq[b, h] * enc[b, s, h]  (VPU multiply + XLU lane reduce)
        scores = jnp.sum(enc * hq[:, None, :], axis=-1)          # (Bt, Ts) f32

        if ns == 1:
            # Whole sequence in one block: plain row softmax, single store.
            m = jnp.max(scores, axis=-1, keepdims=True)
            e = jnp.exp(scores - m)
            denom = jnp.sum(e, axis=-1, keepdims=True)
            out_ref[...] = (e / denom).astype(out_ref.dtype)
        else:
            # Long sequence: raw scores accumulate in the resident lane-dense (Bt, Sp)
            # output block across the last ("arbitrary") S grid axis; softmax on the
            # final step. Overhang columns (>= S) are masked to -inf so they vanish.
            s = pl.program_id(1)
            bt = scores.shape[0]
            col = s * Ts + lax.broadcasted_iota(jnp.int32, (bt, Ts), 1)
            scores = jnp.where(col < S, scores, -jnp.inf)
            start = pl.multiple_of(s * Ts, Ts)                    # Ts is a multiple of 128
            out_ref[:, pl.ds(start, Ts)] = scores

            @pl.when(s == ns - 1)
            def _():
                sc = out_ref[...]                                 # (Bt, Sp), padding = -inf
                m = jnp.max(sc, axis=-1, keepdims=True)
                e = jnp.exp(sc - m)
                denom = jnp.sum(e, axis=-1, keepdims=True)
                out_ref[...] = (e / denom).astype(out_ref.dtype)

    return kernel


def attn_general(hidden, encoder_outputs, weight, bias, *, _force_block_budget_bytes=None):
    """Pallas wrapper.

    hidden:          (B, 1, H)
    encoder_outputs: (B, S, H)  float32 or bfloat16 (streamed as-is, upcast in-kernel)
    weight:          (H, H)     PyTorch nn.Linear weight (out x in)
    bias:            (H,)       softmax-invariant here (see header); unused
    returns:         (B, 1, S)  float32 attention weights
    """
    del bias  # hid . bias is constant over s -> softmax is shift-invariant
    B, S, H = encoder_outputs.shape

    # h'[b, i] = sum_o hid[b, o] * W[o, i] — one MXU-shaped matmul in XLA,
    # instead of B repeated (S,H)x(H,H) projections inside the kernel.
    hq = jnp.dot(hidden[:, 0, :], weight, preferred_element_type=jnp.float32)
    hq = hq.astype(jnp.float32)                                   # (B, H)

    vmem_limit = _vmem_limit_bytes()
    budget = (_force_block_budget_bytes if _force_block_budget_bytes is not None
              else int(vmem_limit * 0.75))                        # headroom for compiler scratch
    enc_itemsize = jnp.dtype(encoder_outputs.dtype).itemsize
    Bt, Ts, ns, Sp = _choose_tiling(B, S, H, enc_itemsize, budget)
    nb = _cdiv(B, Bt)

    out2d = pl.pallas_call(
        _make_attn_kernel(S, Ts, Sp, ns),
        out_shape=jax.ShapeDtypeStruct((B, Sp), jnp.float32),
        grid_spec=pltpu.PrefetchScalarGridSpec(
            num_scalar_prefetch=0,
            grid=(nb, ns),
            in_specs=[
                pl.BlockSpec((Bt, H), lambda b, s: (b, 0)),         # h' = hid @ W
                pl.BlockSpec((Bt, Ts, H), lambda b, s: (b, s, 0)),  # encoder outputs
            ],
            out_specs=pl.BlockSpec((Bt, Sp), lambda b, s: (b, 0)),  # resident across s
        ),
        compiler_params=pltpu.CompilerParams(
            dimension_semantics=("parallel", "arbitrary"),  # batch across TCs, seq is a reduction
            vmem_limit_bytes=vmem_limit,
        ),
    )(hq, encoder_outputs)

    return out2d[:, :S][:, None, :]                                 # (B, 1, S)


def attn_general_ref(hidden, encoder_outputs, weight, bias):
    """Pure-JAX reference mirroring the PyTorch code exactly (including the bias)."""
    energy = jnp.einsum("bsh,oh->bso", encoder_outputs, weight) + bias    # nn.Linear
    scores = jnp.einsum("bqh,bsh->bqs", hidden, energy)                   # bmm
    scores = scores[:, 0, :]                                              # squeeze(1)
    return jax.nn.softmax(scores, axis=1)[:, None, :]                     # softmax(dim=1).unsqueeze(1)


if __name__ == "__main__":
    # --- Test 1: module-sized shapes (single full-S block path) ---
    B, S, H = 2, 8, 32
    k_hid, k_enc, k_w, k_b = jax.random.split(jax.random.PRNGKey(0), 4)
    hidden = jax.random.normal(k_hid, (B, 1, H), dtype=jnp.float32)
    encoder_outputs = jax.random.normal(k_enc, (B, S, H), dtype=jnp.float32)
    bound = 1.0 / (H ** 0.5)          # deterministic nn.Linear(H, H) init range
    weight = jax.random.uniform(k_w, (H, H), jnp.float32, -bound, bound)
    bias = jax.random.uniform(k_b, (H,), jnp.float32, -bound, bound)

    out = jax.block_until_ready(attn_general(hidden, encoder_outputs, weight, bias))
    ref = attn_general_ref(hidden, encoder_outputs, weight, bias)
    assert out.shape == (B, 1, S)
    assert jnp.allclose(out, ref, atol=1e-5, rtol=1e-5), "mismatch vs reference (test 1)"
    assert jnp.allclose(jnp.sum(out, axis=-1), 1.0, atol=1e-5), "softmax rows must sum to 1 (test 1)"

    # --- Test 2: force the S-tiled long-sequence path (v7x small-VMEM code path) ---
    B2, S2, H2 = 4, 300, 128
    k_hid2, k_enc2, k_w2, k_b2 = jax.random.split(jax.random.PRNGKey(1), 4)
    hidden2 = jax.random.normal(k_hid2, (B2, 1, H2), dtype=jnp.float32)
    enc2 = jax.random.normal(k_enc2, (B2, S2, H2), dtype=jnp.float32)
    bound2 = 1.0 / (H2 ** 0.5)
    weight2 = jax.random.uniform(k_w2, (H2, H2), jnp.float32, -bound2, bound2)
    bias2 = jax.random.uniform(k_b2, (H2,), jnp.float32, -bound2, bound2)

    out2 = jax.block_until_ready(
        attn_general(hidden2, enc2, weight2, bias2,
                     _force_block_budget_bytes=1 * 1024 * 1024))
    ref2 = attn_general_ref(hidden2, enc2, weight2, bias2)
    assert out2.shape == (B2, 1, S2)
    assert jnp.allclose(out2, ref2, atol=2e-5, rtol=1e-4), "mismatch vs reference (test 2)"
    assert jnp.allclose(jnp.sum(out2, axis=-1), 1.0, atol=1e-5), "softmax rows must sum to 1 (test 2)"

    print("KERNEL_OK")
</pallas_src>

<mosaic_0001>
module attributes {stable_mosaic.version = 11 : i64} {
  func.func @kernel(%arg0: i32, %arg1: i32, %arg2: memref<2x32xf32, #tpu.memory_space<vmem>>, %arg3: memref<2x8x32xf32, #tpu.memory_space<vmem>>, %arg4: memref<2x8xf32, #tpu.memory_space<vmem>>) attributes {dimension_semantics = [#tpu.dimension_semantics<parallel>, #tpu.dimension_semantics<arbitrary>], iteration_bounds = array<i64: 1, 1>, scalar_prefetch = 0 : i64, scratch_operands = 0 : i64, tpu.core_type = #tpu.core_type<tc>, window_params = [{transform_indices = @transform_0, window_bounds = array<i64: 2, 32>}, {transform_indices = @transform_1, window_bounds = array<i64: 2, 8, 32>}, {transform_indices = @transform_2, window_bounds = array<i64: 2, 8>}]} {
    %c0 = arith.constant 0 : index
    %c0_0 = arith.constant 0 : index
    %0 = vector.load %arg2[%c0, %c0_0] : memref<2x32xf32, #tpu.memory_space<vmem>>, vector<2x32xf32>
    %c0_1 = arith.constant 0 : index
    %c0_2 = arith.constant 0 : index
    %c0_3 = arith.constant 0 : index
    %1 = vector.load %arg3[%c0_1, %c0_2, %c0_3] : memref<2x8x32xf32, #tpu.memory_space<vmem>>, vector<2x8x32xf32>
    %2 = vector.shape_cast %0 : vector<2x32xf32> to vector<2x1x32xf32>
    %3 = vector.broadcast %2 : vector<2x1x32xf32> to vector<2x8x32xf32>
    %4 = arith.mulf %1, %3 : vector<2x8x32xf32>
    %cst = arith.constant dense<0.000000e+00> : vector<2x8xf32>
    %5 = vector.multi_reduction <add>, %4, %cst [2] : vector<2x8x32xf32> to vector<2x8xf32>
    %cst_4 = arith.constant dense<0xFF800000> : vector<2xf32>
    %6 = vector.multi_reduction <maximumf>, %5, %cst_4 [1] : vector<2x8xf32> to vector<2xf32>
    %7 = vector.shape_cast %6 : vector<2xf32> to vector<2x1xf32>
    %8 = vector.broadcast %7 : vector<2x1xf32> to vector<2x8xf32>
    %9 = arith.subf %5, %8 : vector<2x8xf32>
    %10 = math.exp %9 : vector<2x8xf32>
    %cst_5 = arith.constant dense<0.000000e+00> : vector<2xf32>
    %11 = vector.multi_reduction <add>, %10, %cst_5 [1] : vector<2x8xf32> to vector<2xf32>
    %12 = vector.shape_cast %11 : vector<2xf32> to vector<2x1xf32>
    %13 = vector.broadcast %12 : vector<2x1xf32> to vector<2x8xf32>
    %14 = arith.divf %10, %13 : vector<2x8xf32>
    %c0_6 = arith.constant 0 : index
    %c0_7 = arith.constant 0 : index
    %15 = vector.load %arg4[%c0_6, %c0_7] : memref<2x8xf32, #tpu.memory_space<vmem>>, vector<2x8xf32>
    tpu.vector_store %arg4[%c0_6, %c0_7], %14 {strides = array<i32>} : memref<2x8xf32, #tpu.memory_space<vmem>>, vector<2x8xf32>,
    return
  }
  func.func @transform_0(%arg0: i32, %arg1: i32) -> (i32, i32) {
    %c0_i32 = arith.constant 0 : i32
    %c0_i32_0 = arith.constant 0 : i32
    return %arg0, %c0_i32 : i32, i32
  }
  func.func @transform_1(%arg0: i32, %arg1: i32) -> (i32, i32, i32) {
    %c0_i32 = arith.constant 0 : i32
    %c0_i32_0 = arith.constant 0 : i32
    return %arg0, %arg1, %c0_i32 : i32, i32, i32
  }
  func.func @transform_2(%arg0: i32, %arg1: i32) -> (i32, i32) {
    %c0_i32 = arith.constant 0 : i32
    %c0_i32_0 = arith.constant 0 : i32
    return %arg0, %c0_i32 : i32, i32
  }
}

</mosaic_0001>

<llo_original>
// kernel: tpu_custom_call.1
$region0: #{tpu_custom_call.1}
  #allocation0 [shape = 'u32[]', space=smem, size = 0x4, offset = 0x4, fixed_abs, tag = 'smem constant byte address 0x4 - core index']
  #allocation1 [shape = 'u32[144,128]{1,0:T(1,128)}', space=vmem, size = 0x12000, scoped, tag = 'internal scratch']
  %s0 = inlined_call_operand.hbm [shape: f32[2,32], index: 0, kind: input, shape index: {}]
  %s1 = inlined_call_operand.hbm [shape: f32[2,8,32], index: 1, kind: input, shape index: {}]
  %s2 = inlined_call_operand.hbm [shape: f32[2,8], index: 2, kind: output, shape index: {}]
  %s3 = sld [smem:[#allocation0]]
  $region26: #{tpu_custom_call.1} parent=0
    _
  %s5 = ssub.s32 1, %s3
  %s6 = scalar_select 0, %s5, %s3
  $region1: #{tpu_custom_call.1} parent=0
    #allocation2 [shape = 'u8[1024]{0}', space=vmem, size = 0x400, scoped, tag = 'input window, operand 0, single buffered']
    #allocation3 [shape = 's32[1]{0}', space=sflag, size = 0x4, scoped, tag = 'scoped memory for tpu_custom_call.1']
    #allocation4 [shape = 's32[1]{0}', space=sflag, size = 0x4, scoped, tag = 'scoped memory for tpu_custom_call.1']
    #allocation5 [shape = 'u8[8192]{0}', space=vmem, size = 0x2000, scoped, tag = 'input window, operand 1, single buffered']
    #allocation6 [shape = 's32[1]{0}', space=sflag, size = 0x4, scoped, tag = 'scoped memory for tpu_custom_call.1']
    #allocation7 [shape = 'u8[1024]{0}', space=vmem, size = 0x400, scoped, tag = 'output window, operand 0, single buffered']
    %7 = vsyncpa [#allocation3], 0
    %8 = vsyncpa [#allocation6], 0
    %9 = vsyncpa [#allocation4], 0
    // Predicated region
    $region2: #{tpu_custom_call.1} parent=1 // pred_check
      _
    $region3: #{tpu_custom_call.1} parent=1 // pred_check_branch
      %11 = sbr.rel (0) target = $region5
    $region4: #{tpu_custom_call.1} parent=1 // pred_region
      %s13 = ssub.s32 32, 32
      %14 = vsyncadd [#allocation3], %s13
      %s16 = sshll.u32 [#allocation2], 4
      %s17 = int_to_ptr.vmem [resolvable:$true] %s16
      %19 = dma.hbm_to_vmem [thread:$0]  %s0, 32, %s17, [#allocation3]
    $region5: #{tpu_custom_call.1} parent=1 // pred_fallthru
      _
    // Predicated region
    $region6: #{tpu_custom_call.1} parent=1 // pred_check
      _
    $region7: #{tpu_custom_call.1} parent=1 // pred_check_branch
      %21 = sbr.rel (0) target = $region9
    $region8: #{tpu_custom_call.1} parent=1 // pred_region
      %s23 = ssub.s32 256, 256
      %24 = vsyncadd [#allocation6], %s23
      %s25 = sshll.u32 [#allocation5], 4
      %s26 = int_to_ptr.vmem [resolvable:$true] %s25
      %31 = dma.hbm_to_vmem [thread:$0]  %s1, 256, %s26, [#allocation6], 128, 128, 8
    $region9: #{tpu_custom_call.1} parent=1 // pred_fallthru
      _
    // Predicated region
    $region10: #{tpu_custom_call.1} parent=1 // pred_check
      _
    $region11: #{tpu_custom_call.1} parent=1 // pred_check_branch
      %33 = sbr.rel (0) target = $region13
    $region12: #{tpu_custom_call.1} parent=1 // pred_region
      %34 = dma.done [#allocation3], 32
    $region13: #{tpu_custom_call.1} parent=1 // pred_fallthru
      _
    // Predicated region
    $region14: #{tpu_custom_call.1} parent=1 // pred_check
      _
    $region15: #{tpu_custom_call.1} parent=1 // pred_check_branch
      %36 = sbr.rel (0) target = $region17
    $region16: #{tpu_custom_call.1} parent=1 // pred_region
      %37 = dma.done [#allocation6], 256
    $region17: #{tpu_custom_call.1} parent=1 // pred_fallthru
      _
    %v38 = vld [vmem:[#allocation2] sm:$0x3]
    %v39 = vld [vmem:[#allocation5] sm:$0xff]
    %v40 = vld [vmem:[#allocation5 + $0x8] sm:$0xff]
    %v43 = vunpack.c.l.s4 1966171168
    %v44 = vunpack.c.0.s8 %v43
    %v45 = vlaneseq
    %v46 = vshrl.u32 %v45, 7
    %v47 = vsub.s32 %v44, %v46
    %v48 = vrot.slane %v38, %v47
    %v49 = vcombine.high %v48, %v48
    %v51 = vunpack.c.l.s4 1966171168
    %v52 = vunpack.c.0.s8 %v51
    %v53 = vlaneseq
    %v54 = vshrl.u32 %v53, 7
    %v55 = vsub.s32 %v52, %v54
    %v56 = vrot.slane %v48, %v55
    %v58 = vunpack.c.l.s4 1966171168
    %v59 = vunpack.c.0.s8 %v58
    %v60 = vlaneseq
    %v61 = vshrl.u32 %v60, 7
    %v62 = vsub.s32 %v59, %v61
    %v63 = vrot.slane %v49, %v62
    %v64 = vlaneseq
    %v65 = vshrl.u32 %v64, 7
    %v66 = vsub.s32 0, %v65
    %v67 = vrot.slane %v56, %v66
    %v68 = vlaneseq
    %v69 = vshrl.u32 %v68, 7
    %v70 = vsub.s32 0, %v69
    %v71 = vrot.slane %v63, %v70
    %v74 = vmul.f32 %v39, %v67
    %v75 = vmul.f32 %v40, %v71
    %vm76 = vcmask 261120
    %v77 = vsel %vm76, %v74, 0.0
    %78 = vadd.xlane.f32.xlu0 %v77
    %v79 = vpop.xlane.xlu0 %78
    %v80 = vsel %vm76, %v75, 0.0
    %81 = vadd.xlane.f32.xlu0 %v80
    %v82 = vpop.xlane.xlu0 %81
    %v85 = vlaneseq
    %v86 = vand.u32 %v85, 127
    %v87 = vlaneseq
    %v88 = vshrl.u32 %v87, 7
    %v89 = vsub.s32 %v86, %v88
    %v90 = vrot.slane %v79, %v89
    %v91 = vlaneseq
    %v92 = vshrl.u32 %v91, 7
    %v93 = vsub.s32 %v86, %v92
    %v94 = vrot.slane %v82, %v93
    %vm95 = vcmask 1041409
    %v96 = vsel %vm95, %v94, %v90
    %vm98 = vcmask 58368
    %v99 = vsel %vm98, %v96, -inf
    %100 = vmax.xlane.f32.xlu0 %v99
    %v101 = vpop.xlane.xlu0 %100
    %v103 = vlaneseq
    %v104 = vshrl.u32 %v103, 7
    %v105 = vsub.s32 0, %v104
    %v106 = vrot.slane %v101, %v105
    %v107 = vlaneseq
    %v108 = vshrl.u32 %v107, 7
    %v109 = vsub.s32 1, %v108
    %v110 = vrot.slane %v101, %v109
    %v113 = vsub.f32 %v79, %v106
    %v114 = vsub.f32 %v82, %v110
    %v115 = vmul.f32 %v113, 1.442695
    %v116 = vpow.pop %v115
    %v117 = vmul.f32 %v114, 1.442695
    %v118 = vpow.pop %v117
    %121 = vset.pattern.permute.xlu0 0
    %122 = vperm.xlu0 %121, %v116
    %v123 = vpop.permute.xlu0 %122
    %124 = vset.pattern.permute.xlu0 0
    %125 = vperm.xlu0 %124, %v118
    %v126 = vpop.permute.xlu0 %125
    %v127 = vlaneseq
    %v128 = vshrl.u32 %v127, 7
    %v129 = vsub.s32 %v86, %v128
    %v130 = vrot.slane %v123, %v129
    %v131 = vlaneseq
    %v132 = vshrl.u32 %v131, 7
    %v133 = vsub.s32 %v86, %v132
    %v134 = vrot.slane %v126, %v133
    %v135 = vsel %vm95, %v134, %v130
    %v137 = vsel %vm98, %v135, 0.0
    %138 = vadd.xlane.f32.xlu0 %v137
    %v139 = vpop.xlane.xlu0 %138
    %v141 = vlaneseq
    %v142 = vshrl.u32 %v141, 7
    %v143 = vsub.s32 0, %v142
    %v144 = vrot.slane %v139, %v143
    %v145 = vlaneseq
    %v146 = vshrl.u32 %v145, 7
    %v147 = vsub.s32 1, %v146
    %v148 = vrot.slane %v139, %v147
    %v151 = vrcp.pop %v144
    %v152 = vmul.f32 %v116, %v151
    %v153 = vrcp.pop %v148
    %v154 = vmul.f32 %v118, %v153
    %157 = vset.pattern.permute.xlu0 0
    %158 = vperm.xlu0 %157, %v152
    %v159 = vpop.permute.xlu0 %158
    %160 = vset.pattern.permute.xlu0 0
    %161 = vperm.xlu0 %160, %v154
    %v162 = vpop.permute.xlu0 %161
    %v163 = vlaneseq
    %v164 = vshrl.u32 %v163, 7
    %v165 = vsub.s32 %v86, %v164
    %v166 = vrot.slane %v159, %v165
    %v167 = vlaneseq
    %v168 = vshrl.u32 %v167, 7
    %v169 = vsub.s32 %v86, %v168
    %v170 = vrot.slane %v162, %v169
    %v171 = vsel %vm95, %v170, %v166
    %173 = vst.msk [vmem:[#allocation7] sm:$0x3] %vm98, %v171
    // Predicated region
    $region18: #{tpu_custom_call.1} parent=1 // pred_check
      _
    $region19: #{tpu_custom_call.1} parent=1 // pred_check_branch
      %175 = sbr.rel (0) target = $region21
    $region20: #{tpu_custom_call.1} parent=1 // pred_region
      %s177 = ssub.s32 32, 32
      %178 = vsyncadd [#allocation4], %s177
      %s180 = sshll.u32 [#allocation7], 4
      %s181 = int_to_ptr.vmem [resolvable:$true] %s180
      %183 = dma.vmem_to_hbm [thread:$0]  %s181, 32, %s2, [#allocation4]
    $region21: #{tpu_custom_call.1} parent=1 // pred_fallthru
      _
    // Predicated region
    $region22: #{tpu_custom_call.1} parent=1 // pred_check
      _
    $region23: #{tpu_custom_call.1} parent=1 // pred_check_branch
      %185 = sbr.rel (0) target = $region25
    $region24: #{tpu_custom_call.1} parent=1 // pred_region
      %186 = dma.done [#allocation4], 32
    $region25: #{tpu_custom_call.1} parent=1 // pred_fallthru
      _
    %187 = vsyncpa [#allocation3], 1
    %188 = vsyncpa [#allocation6], 1
    %189 = vsyncpa [#allocation4], 1

</llo_original>
